<compile_context>
chip_gen: v6e
topology: v6e:2x2x1
jax: 0.10.0
libtpu: 0.0.40
codegen_flags: <defaults>
</compile_context>

<pallas_src>
import functools

import jax
import jax.numpy as jnp
import numpy as np
from jax.experimental import pallas as pl
from jax.experimental.pallas import tpu as pltpu


# ---------------------------------------------------------------------------
# Helpers
# ---------------------------------------------------------------------------
def _round_up(x, m):
    return ((x + m - 1) // m) * m


def _vmem_budget_bytes():
    """Per-generation VMEM budget: ~75% of physical, capped at 100 MiB.
    128 MiB chips (v5e/v6e) -> 96 MiB; 64 MiB chips (v7x) -> 48 MiB."""
    cap = None
    try:
        cap = getattr(pltpu.get_tpu_info(), "vmem_capacity_bytes", None)
    except Exception:
        cap = None
    if not cap:
        cap = 64 * 1024 * 1024  # conservative fallback (v7x per-TensorCore)
    return min(int(cap) * 3 // 4, 100 * 1024 * 1024)


def _choose_token_tile(s, budget_bytes, k, dim_cnn, dim_last):
    """Pick a token tile TS (multiple of 16) and padded token count S_pad.

    Per-step residency ~ 2x double-buffered bf16 patch/output rows plus
    single-buffered weights; use at most half the budget to leave headroom
    for compiler scratch and the f32 intermediates."""
    weights = 2 * (k * dim_cnn + dim_cnn * dim_last) + 4 * (dim_cnn + dim_last)
    per_row = 2 * 2 * k + 2 * 2 * dim_last          # double-buffered, bf16
    avail = budget_bytes // 2 - weights
    max_ts = max(16, min(2048, avail // max(per_row, 1)))
    max_ts -= max_ts % 16
    max_ts = max(max_ts, 16)
    if s <= max_ts:
        ts = _round_up(s, 16)
        return ts, ts
    # Largest multiple-of-16 divisor of s that fits the budget.
    ts = max_ts
    while ts >= 16:
        if s % ts == 0:
            return ts, s
        ts -= 16
    # No divisor: pad s up to a multiple of max_ts (padded rows masked out of
    # the mean and sliced off the stored features).
    return max_ts, _round_up(s, max_ts)


# ---------------------------------------------------------------------------
# Kernels
# ---------------------------------------------------------------------------
def _fused_conv_prj_kernel(p_ref, wc_ref, bc_ref, wp_ref, bp_ref,
                           proj_ref, fc_ref, *, inv_s, s_actual, s_pad):
    """One grid step = one (batch, token-split, token-tile):
    bf16 conv matmul -> bias+ReLU (f32) -> bf16 projection matmul ->
    bias+ReLU (f32) -> bf16 proj store + f32 token-sum accumulation."""
    st = pl.program_id(2)
    n_st = pl.num_programs(2)

    # conv as im2col matmul (TS, K) @ (K, dim_cnn); f32 accumulation on MXU.
    h = jnp.dot(p_ref[...], wc_ref[...], preferred_element_type=jnp.float32)
    h = jnp.maximum(h + bc_ref[...], 0.0)

    # projection Linear + ReLU (Dropout is eval-mode identity).
    z = jnp.dot(h.astype(wp_ref.dtype), wp_ref[...],
                preferred_element_type=jnp.float32)
    z = jnp.maximum(z + bp_ref[...], 0.0)

    proj_ref[...] = z.astype(proj_ref.dtype)

    # fc accumulator lives in the resident fc output block (same block index
    # across the "arbitrary" token-tile axis).
    @pl.when(st == 0)
    def _():
        fc_ref[...] = jnp.zeros_like(fc_ref)

    if s_pad != s_actual:
        ts = z.shape[0]
        rows = ((pl.program_id(1) * n_st + st) * ts
                + jax.lax.broadcasted_iota(jnp.int32, (ts, 1), 0))
        z = jnp.where(rows < s_actual, z, 0.0)
    fc_ref[...] += jnp.sum(z, axis=0, keepdims=True)

    @pl.when(st == n_st - 1)
    def _():
        fc_ref[...] *= inv_s


def _conv_mean_kernel(p_ref, wc_ref, bc_ref, conv_ref, fc_ref,
                      *, inv_s, s_actual, s_pad):
    """No-projection path: conv matmul + ReLU, bf16 store, fused mean."""
    st = pl.program_id(2)
    n_st = pl.num_programs(2)

    h = jnp.dot(p_ref[...], wc_ref[...], preferred_element_type=jnp.float32)
    h = jnp.maximum(h + bc_ref[...], 0.0)
    conv_ref[...] = h.astype(conv_ref.dtype)

    @pl.when(st == 0)
    def _():
        fc_ref[...] = jnp.zeros_like(fc_ref)

    if s_pad != s_actual:
        ts = h.shape[0]
        rows = ((pl.program_id(1) * n_st + st) * ts
                + jax.lax.broadcasted_iota(jnp.int32, (ts, 1), 0))
        h = jnp.where(rows < s_actual, h, 0.0)
    fc_ref[...] += jnp.sum(h, axis=0, keepdims=True)

    @pl.when(st == n_st - 1)
    def _():
        fc_ref[...] *= inv_s


# ---------------------------------------------------------------------------
# Glue (layout plumbing)
# ---------------------------------------------------------------------------
def _im2col(image, k=3, stride=2, pad=1):
    """NCHW image -> (B, Ho*Wo, K) bf16 patches with K = C*k*k UNPADDED.
    Row order is (b, ho, wo); flat K order is (C, ki, kj), matching the
    PyTorch (O, I, kH, kW) conv-weight flattening."""
    B, C, H, W = image.shape
    xp = jnp.pad(image, ((0, 0), (0, 0), (pad, pad), (pad, pad)))
    Ho = (H + 2 * pad - k) // stride + 1
    Wo = (W + 2 * pad - k) // stride + 1
    cols = []
    for di in range(k):
        for dj in range(k):
            cols.append(xp[:, :, di:di + stride * Ho:stride,
                            dj:dj + stride * Wo:stride])
    p = jnp.stack(cols, axis=2)                          # (B, C, k*k, Ho, Wo)
    p = p.transpose(0, 3, 4, 1, 2).reshape(B, Ho * Wo, C * k * k)
    return p.astype(jnp.bfloat16), Ho, Wo


def pack_params(params, image_channels, k=3):
    """Precompute kernel-layout weights OUTSIDE the jitted hot path:
    transpose to (K, N) / (dim_cnn, dim_out), cast bf16.  No K padding."""
    K = image_channels * k * k
    N = params["cnn_w"].shape[0]
    packed = {
        "cnn_w": params["cnn_w"].reshape(N, K).T.astype(jnp.bfloat16),   # (K, dim_cnn)
        "cnn_b": params["cnn_b"].reshape(1, N).astype(jnp.float32),
    }
    if "prj_w" in params:
        packed["prj_w"] = params["prj_w"].T.astype(jnp.bfloat16)         # (dim_cnn, dim_out)
        packed["prj_b"] = params["prj_b"].reshape(1, -1).astype(jnp.float32)
    return packed


def cnn_encoder_forward(image, packed, require_projection=True):
    wc = packed["cnn_w"]                                 # (K, dim_cnn) bf16
    K, dim_cnn = wc.shape
    patches, Ho, Wo = _im2col(image)                     # (B, S, K) bf16
    B = image.shape[0]
    S = Ho * Wo

    dim_last = packed["prj_w"].shape[1] if require_projection else dim_cnn
    budget = _vmem_budget_bytes()
    TS, S_pad = _choose_token_tile(S, budget, K, dim_cnn, dim_last)
    if S_pad != S:
        patches = jnp.pad(patches, ((0, 0), (0, S_pad - S), (0, 0)))
    n_tiles = S_pad // TS
    # Keep both v7x TensorCores busy when the batch axis alone cannot
    # (odd / unit batch): add a parallel split of the token-tile axis with
    # per-split partial fc sums (reduced by a tiny XLA add below).
    NP = 2 if (B % 2 == 1 and n_tiles >= 2 and n_tiles % 2 == 0) else 1
    n_inner = n_tiles // NP
    grid = (B, NP, n_inner)
    inv_s = 1.0 / float(S)

    cparams = pltpu.CompilerParams(
        dimension_semantics=("parallel", "parallel", "arbitrary"),
        vmem_limit_bytes=budget,
    )
    # Grid-constant operands: single-buffered (no pointless double-buffering).
    const = functools.partial(pl.BlockSpec, pipeline_mode=pl.Buffered(1))

    patch_spec = pl.BlockSpec((None, TS, K),
                              lambda b, p, st: (b, p * n_inner + st, 0))
    fc_spec = pl.BlockSpec((None, None, 1, dim_last),
                           lambda b, p, st: (b, p, 0, 0))

    if require_projection:
        dim_out = dim_last
        flops = 2 * B * S_pad * (K * dim_cnn + dim_cnn * dim_out)
        bytes_accessed = (B * S_pad * K * 2                      # patches (bf16)
                          + K * dim_cnn * 2 + dim_cnn * dim_out * 2
                          + (dim_cnn + dim_out) * 4              # weights / biases
                          + B * S_pad * dim_out * 2              # proj out (bf16)
                          + B * NP * dim_out * 4)                # fc partials
        proj, fc = pl.pallas_call(
            functools.partial(_fused_conv_prj_kernel, inv_s=inv_s,
                              s_actual=S, s_pad=S_pad),
            grid=grid,
            in_specs=[
                patch_spec,
                const((K, dim_cnn), lambda b, p, st: (0, 0)),
                const((1, dim_cnn), lambda b, p, st: (0, 0)),
                const((dim_cnn, dim_out), lambda b, p, st: (0, 0)),
                const((1, dim_out), lambda b, p, st: (0, 0)),
            ],
            out_specs=(
                pl.BlockSpec((None, TS, dim_out),
                             lambda b, p, st: (b, p * n_inner + st, 0)),
                fc_spec,
            ),
            out_shape=(
                jax.ShapeDtypeStruct((B, S_pad, dim_out), jnp.bfloat16),
                jax.ShapeDtypeStruct((B, NP, 1, dim_out), jnp.float32),
            ),
            compiler_params=cparams,
            cost_estimate=pl.CostEstimate(flops=flops, transcendentals=0,
                                          bytes_accessed=bytes_accessed),
        )(patches, packed["cnn_w"], packed["cnn_b"],
          packed["prj_w"], packed["prj_b"])
        if S_pad != S:
            proj = proj[:, :S, :]
        return proj, fc.sum(axis=(1, 2))
    else:
        flops = 2 * B * S_pad * K * dim_cnn
        bytes_accessed = (B * S_pad * K * 2
                          + K * dim_cnn * 2 + dim_cnn * 4
                          + B * S_pad * dim_cnn * 2
                          + B * NP * dim_cnn * 4)
        conv_feats, fc = pl.pallas_call(
            functools.partial(_conv_mean_kernel, inv_s=inv_s,
                              s_actual=S, s_pad=S_pad),
            grid=grid,
            in_specs=[
                patch_spec,
                const((K, dim_cnn), lambda b, p, st: (0, 0)),
                const((1, dim_cnn), lambda b, p, st: (0, 0)),
            ],
            out_specs=(
                pl.BlockSpec((None, TS, dim_cnn),
                             lambda b, p, st: (b, p * n_inner + st, 0)),
                fc_spec,
            ),
            out_shape=(
                jax.ShapeDtypeStruct((B, S_pad, dim_cnn), jnp.bfloat16),
                jax.ShapeDtypeStruct((B, NP, 1, dim_cnn), jnp.float32),
            ),
            compiler_params=cparams,
            cost_estimate=pl.CostEstimate(flops=flops, transcendentals=0,
                                          bytes_accessed=bytes_accessed),
        )(patches, packed["cnn_w"], packed["cnn_b"])
        if S_pad != S:
            conv_feats = conv_feats[:, :S, :]
        return conv_feats, fc.sum(axis=(1, 2))


# ---------------------------------------------------------------------------
# Pure-JAX reference (for correctness check)
# ---------------------------------------------------------------------------
def _reference_forward(image, params, require_projection=True):
    conv = jax.lax.conv_general_dilated(
        image, params["cnn_w"], window_strides=(2, 2),
        padding=((1, 1), (1, 1)),
        dimension_numbers=("NCHW", "OIHW", "NCHW"))
    conv = jax.nn.relu(conv + params["cnn_b"][None, :, None, None])
    B, N, Ho, Wo = conv.shape
    feats = conv.reshape(B, N, Ho * Wo).transpose(0, 2, 1)        # (B, S, N)
    if require_projection:
        feats = jax.nn.relu(feats @ params["prj_w"].T + params["prj_b"])
    fc = feats.mean(axis=1)
    return feats, fc


# ---------------------------------------------------------------------------
# Example run
# ---------------------------------------------------------------------------
if __name__ == "__main__":
    key = jax.random.PRNGKey(0)
    k_img, k_cw, k_cb, k_pw, k_pb = jax.random.split(key, 5)

    B, C_in, H, W = 2, 4, 16, 16
    dim_cnn, dim_out = 128, 128                          # small, lane-friendly

    image = jax.random.normal(k_img, (B, C_in, H, W), jnp.float32)
    params = {
        "cnn_w": 0.10 * jax.random.normal(k_cw, (dim_cnn, C_in, 3, 3), jnp.float32),
        "cnn_b": 0.01 * jax.random.normal(k_cb, (dim_cnn,), jnp.float32),
        "prj_w": 0.05 * jax.random.normal(k_pw, (dim_out, dim_cnn), jnp.float32),
        "prj_b": 0.01 * jax.random.normal(k_pb, (dim_out,), jnp.float32),
    }
    packed = jax.block_until_ready(pack_params(params, C_in))     # outside jit

    S = (H // 2) * (W // 2)                              # stride-2 stand-in conv

    # Projection path (fused conv + prj + mean kernel)
    fwd = jax.jit(functools.partial(cnn_encoder_forward, require_projection=True))
    conv_feats, fc_feats = fwd(image, packed)
    jax.block_until_ready((conv_feats, fc_feats))
    assert conv_feats.shape == (B, S, dim_out), conv_feats.shape
    assert fc_feats.shape == (B, dim_out), fc_feats.shape

    ref_feats, ref_fc = _reference_forward(image, params, require_projection=True)
    np.testing.assert_allclose(np.asarray(conv_feats.astype(jnp.float32)),
                               np.asarray(ref_feats), rtol=8e-2, atol=8e-2)
    np.testing.assert_allclose(np.asarray(fc_feats), np.asarray(ref_fc),
                               rtol=8e-2, atol=8e-2)

    # No-projection path (conv + fused mean kernel)
    fwd_np = jax.jit(functools.partial(cnn_encoder_forward, require_projection=False))
    cf2, fc2 = fwd_np(image, packed)
    jax.block_until_ready((cf2, fc2))
    assert cf2.shape == (B, S, dim_cnn), cf2.shape
    assert fc2.shape == (B, dim_cnn), fc2.shape
    ref_f2, ref_fc2 = _reference_forward(image, params, require_projection=False)
    np.testing.assert_allclose(np.asarray(cf2.astype(jnp.float32)),
                               np.asarray(ref_f2), rtol=8e-2, atol=8e-2)
    np.testing.assert_allclose(np.asarray(fc2), np.asarray(ref_fc2),
                               rtol=8e-2, atol=8e-2)

    print("KERNEL_OK")
</pallas_src>

<mosaic_0001>
module attributes {stable_mosaic.version = 11 : i64} {
  func.func @_fused_conv_prj_kernel(%arg0: i32, %arg1: i32, %arg2: i32, %arg3: memref<1x64x36xbf16, #tpu.memory_space<vmem>>, %arg4: memref<36x128xbf16, #tpu.memory_space<vmem>>, %arg5: memref<1x128xf32, #tpu.memory_space<vmem>>, %arg6: memref<128x128xbf16, #tpu.memory_space<vmem>>, %arg7: memref<1x128xf32, #tpu.memory_space<vmem>>, %arg8: memref<1x64x128xbf16, #tpu.memory_space<vmem>>, %arg9: memref<1x1x1x128xf32, #tpu.memory_space<vmem>>) attributes {dimension_semantics = [#tpu.dimension_semantics<parallel>, #tpu.dimension_semantics<parallel>, #tpu.dimension_semantics<arbitrary>], iteration_bounds = array<i64: 2, 1, 1>, scalar_prefetch = 0 : i64, scratch_operands = 0 : i64, tpu.core_type = #tpu.core_type<tc>, window_params = [{transform_indices = @transform_0, window_bounds = array<i64: 1, 64, 36>}, {pipeline_mode = #tpu.pipeline_mode<synchronous>, transform_indices = @transform_1, window_bounds = array<i64: 36, 128>}, {pipeline_mode = #tpu.pipeline_mode<synchronous>, transform_indices = @transform_2, window_bounds = array<i64: 1, 128>}, {pipeline_mode = #tpu.pipeline_mode<synchronous>, transform_indices = @transform_3, window_bounds = array<i64: 128, 128>}, {pipeline_mode = #tpu.pipeline_mode<synchronous>, transform_indices = @transform_4, window_bounds = array<i64: 1, 128>}, {transform_indices = @transform_5, window_bounds = array<i64: 1, 64, 128>}, {transform_indices = @transform_6, window_bounds = array<i64: 1, 1, 1, 128>}]} {
    %c0 = arith.constant 0 : index
    %c0_0 = arith.constant 0 : index
    %c0_1 = arith.constant 0 : index
    %0 = vector.load %arg3[%c0, %c0_0, %c0_1] : memref<1x64x36xbf16, #tpu.memory_space<vmem>>, vector<1x64x36xbf16>
    %1 = vector.shape_cast %0 : vector<1x64x36xbf16> to vector<64x36xbf16>
    %c0_2 = arith.constant 0 : index
    %c0_3 = arith.constant 0 : index
    %2 = vector.load %arg4[%c0_2, %c0_3] : memref<36x128xbf16, #tpu.memory_space<vmem>>, vector<36x128xbf16>
    %cst = arith.constant dense<0.000000e+00> : vector<64x128xf32>
    %3 = tpu.matmul %1, %2, %cst {dimension_numbers = #tpu.dot_dimension_numbers<[1], [0], [0], [1], [0, 0, 1, 1], [], []>} : vector<64x36xbf16>, vector<36x128xbf16>, vector<64x128xf32> -> vector<64x128xf32>
    %c0_4 = arith.constant 0 : index
    %c0_5 = arith.constant 0 : index
    %4 = vector.load %arg5[%c0_4, %c0_5] : memref<1x128xf32, #tpu.memory_space<vmem>>, vector<1x128xf32>
    %5 = vector.broadcast %4 : vector<1x128xf32> to vector<64x128xf32>
    %6 = arith.addf %3, %5 : vector<64x128xf32>
    %cst_6 = arith.constant 0.000000e+00 : f32
    %7 = vector.broadcast %cst_6 : f32 to vector<64x128xf32>
    %8 = arith.maximumf %6, %7 : vector<64x128xf32>
    %9 = arith.truncf %8 : vector<64x128xf32> to vector<64x128xbf16>
    %c0_7 = arith.constant 0 : index
    %c0_8 = arith.constant 0 : index
    %10 = vector.load %arg6[%c0_7, %c0_8] : memref<128x128xbf16, #tpu.memory_space<vmem>>, vector<128x128xbf16>
    %cst_9 = arith.constant dense<0.000000e+00> : vector<64x128xf32>
    %11 = tpu.matmul %9, %10, %cst_9 {dimension_numbers = #tpu.dot_dimension_numbers<[1], [0], [0], [1], [0, 0, 1, 1], [], []>} : vector<64x128xbf16>, vector<128x128xbf16>, vector<64x128xf32> -> vector<64x128xf32>
    %c0_10 = arith.constant 0 : index
    %c0_11 = arith.constant 0 : index
    %12 = vector.load %arg7[%c0_10, %c0_11] : memref<1x128xf32, #tpu.memory_space<vmem>>, vector<1x128xf32>
    %13 = vector.broadcast %12 : vector<1x128xf32> to vector<64x128xf32>
    %14 = arith.addf %11, %13 : vector<64x128xf32>
    %cst_12 = arith.constant 0.000000e+00 : f32
    %15 = vector.broadcast %cst_12 : f32 to vector<64x128xf32>
    %16 = arith.maximumf %14, %15 : vector<64x128xf32>
    %17 = arith.truncf %16 : vector<64x128xf32> to vector<64x128xbf16>
    %c0_13 = arith.constant 0 : index
    %c0_14 = arith.constant 0 : index
    %c0_15 = arith.constant 0 : index
    %18 = vector.load %arg8[%c0_13, %c0_14, %c0_15] : memref<1x64x128xbf16, #tpu.memory_space<vmem>>, vector<1x64x128xbf16>
    %19 = vector.shape_cast %18 : vector<1x64x128xbf16> to vector<64x128xbf16>
    %20 = vector.shape_cast %17 : vector<64x128xbf16> to vector<1x64x128xbf16>
    tpu.vector_store %arg8[%c0_13, %c0_14, %c0_15], %20 {strides = array<i32>} : memref<1x64x128xbf16, #tpu.memory_space<vmem>>, vector<1x64x128xbf16>,
    %c0_i32 = arith.constant 0 : i32
    %21 = arith.cmpi eq, %arg2, %c0_i32 : i32
    %22 = arith.extui %21 : i1 to i32
    %c0_i32_16 = arith.constant 0 : i32
    %23 = arith.cmpi ne, %22, %c0_i32_16 : i32
    scf.if %23 {
      %cst_28 = arith.constant 0.000000e+00 : f32
      %35 = vector.broadcast %cst_28 : f32 to vector<1x128xf32>
      %c0_29 = arith.constant 0 : index
      %c0_30 = arith.constant 0 : index
      %c0_31 = arith.constant 0 : index
      %c0_32 = arith.constant 0 : index
      %36 = vector.load %arg9[%c0_29, %c0_30, %c0_31, %c0_32] : memref<1x1x1x128xf32, #tpu.memory_space<vmem>>, vector<1x1x1x128xf32>
      %37 = vector.shape_cast %36 : vector<1x1x1x128xf32> to vector<1x128xf32>
      %38 = vector.shape_cast %35 : vector<1x128xf32> to vector<1x1x1x128xf32>
      tpu.vector_store %arg9[%c0_29, %c0_30, %c0_31, %c0_32], %38 {strides = array<i32>} : memref<1x1x1x128xf32, #tpu.memory_space<vmem>>, vector<1x1x1x128xf32>,
    } else {
    }
    %c0_17 = arith.constant 0 : index
    %c0_18 = arith.constant 0 : index
    %c0_19 = arith.constant 0 : index
    %c0_20 = arith.constant 0 : index
    %24 = vector.load %arg9[%c0_17, %c0_18, %c0_19, %c0_20] : memref<1x1x1x128xf32, #tpu.memory_space<vmem>>, vector<1x1x1x128xf32>
    %25 = vector.shape_cast %24 : vector<1x1x1x128xf32> to vector<1x128xf32>
    %cst_21 = arith.constant dense<0.000000e+00> : vector<128xf32>
    %26 = vector.multi_reduction <add>, %16, %cst_21 [0] : vector<64x128xf32> to vector<128xf32>
    %27 = vector.shape_cast %26 : vector<128xf32> to vector<1x128xf32>
    %28 = arith.addf %25, %27 : vector<1x128xf32>
    %c0_22 = arith.constant 0 : index
    %c0_23 = arith.constant 0 : index
    %c0_24 = arith.constant 0 : index
    %c0_25 = arith.constant 0 : index
    %29 = vector.load %arg9[%c0_22, %c0_23, %c0_24, %c0_25] : memref<1x1x1x128xf32, #tpu.memory_space<vmem>>, vector<1x1x1x128xf32>
    %30 = vector.shape_cast %29 : vector<1x1x1x128xf32> to vector<1x128xf32>
    %31 = vector.shape_cast %28 : vector<1x128xf32> to vector<1x1x1x128xf32>
    tpu.vector_store %arg9[%c0_22, %c0_23, %c0_24, %c0_25], %31 {strides = array<i32>} : memref<1x1x1x128xf32, #tpu.memory_space<vmem>>, vector<1x1x1x128xf32>,
    %c0_i32_26 = arith.constant 0 : i32
    %32 = arith.cmpi eq, %arg2, %c0_i32_26 : i32
    %33 = arith.extui %32 : i1 to i32
    %c0_i32_27 = arith.constant 0 : i32
    %34 = arith.cmpi ne, %33, %c0_i32_27 : i32
    scf.if %34 {
      %c0_28 = arith.constant 0 : index
      %c0_29 = arith.constant 0 : index
      %c0_30 = arith.constant 0 : index
      %c0_31 = arith.constant 0 : index
      %35 = vector.load %arg9[%c0_28, %c0_29, %c0_30, %c0_31] : memref<1x1x1x128xf32, #tpu.memory_space<vmem>>, vector<1x1x1x128xf32>
      %36 = vector.shape_cast %35 : vector<1x1x1x128xf32> to vector<1x128xf32>
      %cst_32 = arith.constant 1.562500e-02 : f32
      %37 = vector.broadcast %cst_32 : f32 to vector<1x128xf32>
      %38 = arith.mulf %36, %37 : vector<1x128xf32>
      %c0_33 = arith.constant 0 : index
      %c0_34 = arith.constant 0 : index
      %c0_35 = arith.constant 0 : index
      %c0_36 = arith.constant 0 : index
      %39 = vector.load %arg9[%c0_33, %c0_34, %c0_35, %c0_36] : memref<1x1x1x128xf32, #tpu.memory_space<vmem>>, vector<1x1x1x128xf32>
      %40 = vector.shape_cast %39 : vector<1x1x1x128xf32> to vector<1x128xf32>
      %41 = vector.shape_cast %38 : vector<1x128xf32> to vector<1x1x1x128xf32>
      tpu.vector_store %arg9[%c0_33, %c0_34, %c0_35, %c0_36], %41 {strides = array<i32>} : memref<1x1x1x128xf32, #tpu.memory_space<vmem>>, vector<1x1x1x128xf32>,
    } else {
    }
    return
  }
  func.func @transform_0(%arg0: i32, %arg1: i32, %arg2: i32) -> (i32, i32, i32) {
    %c1_i32 = arith.constant 1 : i32
    %0 = arith.muli %arg1, %c1_i32 : i32
    %1 = arith.addi %0, %arg2 : i32
    %c0_i32 = arith.constant 0 : i32
    %c0_i32_0 = arith.constant 0 : i32
    return %arg0, %1, %c0_i32 : i32, i32, i32
  }
  func.func @transform_1(%arg0: i32, %arg1: i32, %arg2: i32) -> (i32, i32) {
    %c0_i32 = arith.constant 0 : i32
    %c0_i32_0 = arith.constant 0 : i32
    %c0_i32_1 = arith.constant 0 : i32
    return %c0_i32, %c0_i32_0 : i32, i32
  }
  func.func @transform_2(%arg0: i32, %arg1: i32, %arg2: i32) -> (i32, i32) {
    %c0_i32 = arith.constant 0 : i32
    %c0_i32_0 = arith.constant 0 : i32
    %c0_i32_1 = arith.constant 0 : i32
    return %c0_i32, %c0_i32_0 : i32, i32
  }
  func.func @transform_3(%arg0: i32, %arg1: i32, %arg2: i32) -> (i32, i32) {
    %c0_i32 = arith.constant 0 : i32
    %c0_i32_0 = arith.constant 0 : i32
    %c0_i32_1 = arith.constant 0 : i32
    return %c0_i32, %c0_i32_0 : i32, i32
  }
  func.func @transform_4(%arg0: i32, %arg1: i32, %arg2: i32) -> (i32, i32) {
    %c0_i32 = arith.constant 0 : i32
    %c0_i32_0 = arith.constant 0 : i32
    %c0_i32_1 = arith.constant 0 : i32
    return %c0_i32, %c0_i32_0 : i32, i32
  }
  func.func @transform_5(%arg0: i32, %arg1: i32, %arg2: i32) -> (i32, i32, i32) {
    %c1_i32 = arith.constant 1 : i32
    %0 = arith.muli %arg1, %c1_i32 : i32
    %1 = arith.addi %0, %arg2 : i32
    %c0_i32 = arith.constant 0 : i32
    %c0_i32_0 = arith.constant 0 : i32
    return %arg0, %1, %c0_i32 : i32, i32, i32
  }
  func.func @transform_6(%arg0: i32, %arg1: i32, %arg2: i32) -> (i32, i32, i32, i32) {
    %c0_i32 = arith.constant 0 : i32
    %c0_i32_0 = arith.constant 0 : i32
    %c0_i32_1 = arith.constant 0 : i32
    return %arg0, %arg1, %c0_i32, %c0_i32_0 : i32, i32, i32, i32
  }
}

</mosaic_0001>

<llo_original>
// kernel: cnn_encoder_forward.1
$region0: #{cnn_encoder_forward.1}
  #allocation0 [shape = 'u32[]', space=smem, size = 0x4, offset = 0x4, fixed_abs, tag = 'smem constant byte address 0x4 - core index']
  #allocation1 [shape = 'u32[144,128]{1,0:T(1,128)}', space=vmem, size = 0x12000, scoped, tag = 'internal scratch']
  %s0 = inlined_call_operand.vmem [shape: bf16[2,64,36], index: 0, kind: input, shape index: {}]
  %s1 = inlined_call_operand.vmem [shape: bf16[36,128], index: 1, kind: input, shape index: {}]
  %s2 = inlined_call_operand.vmem [shape: f32[1,128], index: 2, kind: input, shape index: {}]
  %s3 = inlined_call_operand.vmem [shape: bf16[128,128], index: 3, kind: input, shape index: {}]
  %s4 = inlined_call_operand.vmem [shape: f32[1,128], index: 4, kind: input, shape index: {}]
  %s5 = inlined_call_operand.hbm [shape: bf16[2,64,128], index: 5, kind: output, shape index: {0}]
  %s6 = inlined_call_operand.hbm [shape: f32[2,1,1,128], index: 6, kind: output, shape index: {1}]
  %7 = xla_tuple %s5, %s6
  %s8 = sld [smem:[#allocation0]]
  $region69: #{cnn_encoder_forward.1} parent=0
    _
  %s10 = ssub.s32 1, %s8
  %s11 = scalar_select 0, %s10, %s8
  $region1: #{cnn_encoder_forward.1} parent=0
    #allocation2 [shape = 'u8[32768]{0}', space=vmem, size = 0x8000, scoped, tag = 'output window, operand 0']
    #allocation3 [shape = 's32[2]{0}', space=sflag, size = 0x8, scoped, tag = 'scoped memory for cnn_encoder_forward.1']
    #allocation4 [shape = 'u8[1024]{0}', space=vmem, size = 0x400, scoped, tag = 'output window, operand 1']
    #allocation5 [shape = 's32[2]{0}', space=sflag, size = 0x8, scoped, tag = 'scoped memory for cnn_encoder_forward.1']
    %12 = vsyncpa [#allocation3], 0
    %s13 = scalar_lea.sflag [#allocation3], 1
    %14 = vsyncpa %s13, 0
    %15 = vsyncpa [#allocation5], 0
    %s16 = scalar_lea.sflag [#allocation5], 1
    %17 = vsyncpa %s16, 0
    loop: start=0, step=1, limit=4
    $region2: #{cnn_encoder_forward.1} parent=1 // loop_pre_header
      _
    $region3: #{cnn_encoder_forward.1} parent=1 // loop_header
      %s19 = sphi 0, %s23
      %p20 = scmp.ge.s32.totalorder %s19, 4
      %s26 = sphi 0, %s45
      %s27 = sphi 0, %s41
      %s28 = sphi 0, %s37
      %s29 = sphi 0, %s26
      %s30 = sphi 0, %s27
      %s31 = sphi 0, %s28
      %s32 = sphi 0, %s29
      %s33 = sphi 0, %s30
      %s34 = sphi 0, %s31
      %s52 = sphi 0, %s54
      %s55 = sphi 0, %s52
      %s56 = sphi 0, %s55
      %s72 = sphi 0, %s56
      %s76 = sphi 0, %s76
      %s78 = sphi 0, %s76
      %s79 = sphi 0, %s78
      %s93 = sphi 0, %s79
      %s97 = sphi 0, %s97
      %s99 = sphi 0, %s97
      %s100 = sphi 0, %s99
      %s114 = sphi 0, %s100
      %s118 = sphi 0, %s118
      %s120 = sphi 0, %s118
      %s121 = sphi 0, %s120
      %s135 = sphi 0, %s121
      %s139 = sphi 0, %s139
      %s141 = sphi 0, %s139
      %s142 = sphi 0, %s141
      %s156 = sphi 0, %s142
      %s166 = sphi 0, %s168
      %s169 = sphi 0, %s166
      %s170 = sphi 0, %s169
      %s186 = sphi 0, %s170
      %s194 = sphi 0, %s196
      %s197 = sphi 0, %s194
      %s198 = sphi 0, %s197
      %s214 = sphi 0, %s198
    $region4: #{cnn_encoder_forward.1} parent=1 // loop_header_branch
      %22 = sbr.rel (%p20) target = $region8
    $region5: #{cnn_encoder_forward.1} parent=1 // loop_body
      %s24 = ssub.s32 %s19, 1
      %s25 = ssub.s32 %s19, 2
      %s35 = sadd.s32 1, %s28
      %p36 = scmp.ge.s32.totalorder %s35, 1
      %s37 = scalar_select %p36, 0, %s35
      %s38 = sadd.s32 1, %s27
      %s39 = scalar_select %p36, %s38, %s27
      %p40 = scmp.ge.s32.totalorder %s39, 1
      %s41 = scalar_select %p40, 0, %s39
      %s42 = sadd.s32 1, %s26
      %s43 = scalar_select %p40, %s42, %s26
      %p44 = scmp.ge.s32.totalorder %s43, 2
      %s45 = scalar_select %p44, 0, %s43
      %s46 = sadd.s32 %s27, %s28
      %s47 = sadd.s32 %s41, %s37
      %s48 = ssub.s32 %s26, %s45
      %s49 = ssub.s32 %s46, %s47
      %s50 = sor.u32 %s48, %s49
      %p51 = scmp.eq.s32.totalorder %s50, 0
      %s53 = sadd.s32 %s52, 1
      %s54 = scalar_select %p51, %s52, %s53
      %p57 = pneg %p51
      %p58 = scmp.eq.s32.totalorder %s19, 1
      %p59 = por %p57, %p58
      %p60 = scmp.ne.s32.totalorder %s52, %s55
      %p61 = scmp.eq.s32.totalorder %s19, 0
      %p62 = por %p60, %p61
      %p63 = scmp.ne.s32.totalorder %s52, %s55
      %p64 = scmp.eq.s32.totalorder %s24, 1
      %p65 = por %p63, %p64
      %p66 = scmp.ne.s32.totalorder %s55, %s56
      %p67 = scmp.eq.s32.totalorder %s24, 0
      %p68 = por %p66, %p67
      %p69 = scmp.ne.s32.totalorder %s55, %s56
      %p70 = scmp.eq.s32.totalorder %s25, 1
      %p71 = por %p69, %p70
      %p73 = scmp.ne.s32.totalorder %s56, %s72
      %p74 = scmp.eq.s32.totalorder %s25, 0
      %p75 = por %p73, %p74
      %s77 = sadd.s32 %s76, 1
      %p80 = scmp.eq.s32.totalorder %s19, 1
      %p81 = scmp.ne.s32.totalorder %s76, %s78
      %p82 = scmp.eq.s32.totalorder %s19, 0
      %p83 = por %p81, %p82
      %p84 = scmp.ne.s32.totalorder %s76, %s78
      %p85 = scmp.eq.s32.totalorder %s24, 1
      %p86 = por %p84, %p85
      %p87 = scmp.ne.s32.totalorder %s78, %s79
      %p88 = scmp.eq.s32.totalorder %s24, 0
      %p89 = por %p87, %p88
      %p90 = scmp.ne.s32.totalorder %s78, %s79
      %p91 = scmp.eq.s32.totalorder %s25, 1
      %p92 = por %p90, %p91
      %p94 = scmp.ne.s32.totalorder %s79, %s93
      %p95 = scmp.eq.s32.totalorder %s25, 0
      %p96 = por %p94, %p95
      %s98 = sadd.s32 %s97, 1
      %p101 = scmp.eq.s32.totalorder %s19, 1
      %p102 = scmp.ne.s32.totalorder %s97, %s99
      %p103 = scmp.eq.s32.totalorder %s19, 0
      %p104 = por %p102, %p103
      %p105 = scmp.ne.s32.totalorder %s97, %s99
      %p106 = scmp.eq.s32.totalorder %s24, 1
      %p107 = por %p105, %p106
      %p108 = scmp.ne.s32.totalorder %s99, %s100
      %p109 = scmp.eq.s32.totalorder %s24, 0
      %p110 = por %p108, %p109
      %p111 = scmp.ne.s32.totalorder %s99, %s100
      %p112 = scmp.eq.s32.totalorder %s25, 1
      %p113 = por %p111, %p112
      %p115 = scmp.ne.s32.totalorder %s100, %s114
      %p116 = scmp.eq.s32.totalorder %s25, 0
      %p117 = por %p115, %p116
      %s119 = sadd.s32 %s118, 1
      %p122 = scmp.eq.s32.totalorder %s19, 1
      %p123 = scmp.ne.s32.totalorder %s118, %s120
      %p124 = scmp.eq.s32.totalorder %s19, 0
      %p125 = por %p123, %p124
      %p126 = scmp.ne.s32.totalorder %s118, %s120
      %p127 = scmp.eq.s32.totalorder %s24, 1
      %p128 = por %p126, %p127
      %p129 = scmp.ne.s32.totalorder %s120, %s121
      %p130 = scmp.eq.s32.totalorder %s24, 0
      %p131 = por %p129, %p130
      %p132 = scmp.ne.s32.totalorder %s120, %s121
      %p133 = scmp.eq.s32.totalorder %s25, 1
      %p134 = por %p132, %p133
      %p136 = scmp.ne.s32.totalorder %s121, %s135
      %p137 = scmp.eq.s32.totalorder %s25, 0
      %p138 = por %p136, %p137
      %s140 = sadd.s32 %s139, 1
      %p143 = scmp.eq.s32.totalorder %s19, 1
      %p144 = scmp.ne.s32.totalorder %s139, %s141
      %p145 = scmp.eq.s32.totalorder %s19, 0
      %p146 = por %p144, %p145
      %p147 = scmp.ne.s32.totalorder %s139, %s141
      %p148 = scmp.eq.s32.totalorder %s24, 1
      %p149 = por %p147, %p148
      %p150 = scmp.ne.s32.totalorder %s141, %s142
      %p151 = scmp.eq.s32.totalorder %s24, 0
      %p152 = por %p150, %p151
      %p153 = scmp.ne.s32.totalorder %s141, %s142
      %p154 = scmp.eq.s32.totalorder %s25, 1
      %p155 = por %p153, %p154
      %p157 = scmp.ne.s32.totalorder %s142, %s156
      %p158 = scmp.eq.s32.totalorder %s25, 0
      %p159 = por %p157, %p158
      %s160 = sadd.s32 %s27, %s28
      %s161 = sadd.s32 %s41, %s37
      %s162 = ssub.s32 %s26, %s45
      %s163 = ssub.s32 %s160, %s161
      %s164 = sor.u32 %s162, %s163
      %p165 = scmp.eq.s32.totalorder %s164, 0
      %s167 = sadd.s32 %s166, 1
      %s168 = scalar_select %p165, %s166, %s167
      %p171 = pneg %p165
      %p172 = scmp.eq.s32.totalorder %s19, 1
      %p173 = por %p171, %p172
      %p174 = scmp.ne.s32.totalorder %s166, %s169
      %p175 = scmp.eq.s32.totalorder %s19, 0
      %p176 = por %p174, %p175
      %p177 = scmp.ne.s32.totalorder %s166, %s169
      %p178 = scmp.eq.s32.totalorder %s24, 1
      %p179 = por %p177, %p178
      %p180 = scmp.ne.s32.totalorder %s169, %s170
      %p181 = scmp.eq.s32.totalorder %s24, 0
      %p182 = por %p180, %p181
      %p183 = scmp.ne.s32.totalorder %s169, %s170
      %p184 = scmp.eq.s32.totalorder %s25, 1
      %p185 = por %p183, %p184
      %p187 = scmp.ne.s32.totalorder %s170, %s186
      %p188 = scmp.eq.s32.totalorder %s25, 0
      %p189 = por %p187, %p188
      %s190 = ssub.s32 %s26, %s45
      %s191 = ssub.s32 %s27, %s41
      %s192 = sor.u32 %s190, %s191
      %p193 = scmp.eq.s32.totalorder %s192, 0
      %s195 = sadd.s32 %s194, 1
      %s196 = scalar_select %p193, %s194, %s195
      %p199 = pneg %p193
      %p200 = scmp.eq.s32.totalorder %s19, 1
      %p201 = por %p199, %p200
      %p202 = scmp.ne.s32.totalorder %s194, %s197
      %p203 = scmp.eq.s32.totalorder %s19, 0
      %p204 = por %p202, %p203
      %p205 = scmp.ne.s32.totalorder %s194, %s197
      %p206 = scmp.eq.s32.totalorder %s24, 1
      %p207 = por %p205, %p206
      %p208 = scmp.ne.s32.totalorder %s197, %s198
      %p209 = scmp.eq.s32.totalorder %s24, 0
      %p210 = por %p208, %p209
      %p211 = scmp.ne.s32.totalorder %s197, %s198
      %p212 = scmp.eq.s32.totalorder %s25, 1
      %p213 = por %p211, %p212
      %p215 = scmp.ne.s32.totalorder %s198, %s214
      %p216 = scmp.eq.s32.totalorder %s25, 0
      %p217 = por %p215, %p216
      %p218 = scmp.le.s32.totalorder 1, %s19
      %p219 = scmp.lt.s32.totalorder %s19, 3
      %p220 = pnand %p218, %p219
      %p221 = pneg %p220
      // Predicated region
      $region9: #{cnn_encoder_forward.1} parent=5 // pred_check
        _
      $region10: #{cnn_encoder_forward.1} parent=5 // pred_check_branch
        %223 = sbr.rel (%p220) target = $region12
      $region11: #{cnn_encoder_forward.1} parent=5 // pred_region
        %s224 = ssub.s32 %s19, 1
        // Predicated region
        $region13: #{cnn_encoder_forward.1} parent=11 // pred_check
          %p225 = pneg %p89
        $region14: #{cnn_encoder_forward.1} parent=11 // pred_check_branch
          %227 = sbr.rel (%p225) target = $region16
        $region15: #{cnn_encoder_forward.1} parent=11 // pred_region
          _
        $region16: #{cnn_encoder_forward.1} parent=11 // pred_fallthru
          _
        // Predicated region
        $region17: #{cnn_encoder_forward.1} parent=11 // pred_check
          %p228 = pneg %p110
        $region18: #{cnn_encoder_forward.1} parent=11 // pred_check_branch
          %230 = sbr.rel (%p228) target = $region20
        $region19: #{cnn_encoder_forward.1} parent=11 // pred_region
          _
        $region20: #{cnn_encoder_forward.1} parent=11 // pred_fallthru
          _
        // Predicated region
        $region21: #{cnn_encoder_forward.1} parent=11 // pred_check
          %p231 = pneg %p131
        $region22: #{cnn_encoder_forward.1} parent=11 // pred_check_branch
          %233 = sbr.rel (%p231) target = $region24
        $region23: #{cnn_encoder_forward.1} parent=11 // pred_region
          _
        $region24: #{cnn_encoder_forward.1} parent=11 // pred_fallthru
          _
        // Predicated region
        $region25: #{cnn_encoder_forward.1} parent=11 // pred_check
          %p234 = pneg %p152
        $region26: #{cnn_encoder_forward.1} parent=11 // pred_check_branch
          %236 = sbr.rel (%p234) target = $region28
        $region27: #{cnn_encoder_forward.1} parent=11 // pred_region
          _
        $region28: #{cnn_encoder_forward.1} parent=11 // pred_fallthru
          _
      $region12: #{cnn_encoder_forward.1} parent=5 // pred_fallthru
        _
      %p237 = scmp.lt.s32.totalorder %s19, 2
      // Predicated region
      $region29: #{cnn_encoder_forward.1} parent=5 // pred_check
        %p238 = pneg %p237
      $region30: #{cnn_encoder_forward.1} parent=5 // pred_check_branch
        %240 = sbr.rel (%p238) target = $region32
      $region31: #{cnn_encoder_forward.1} parent=5 // pred_region
        // Predicated region
        $region33: #{cnn_encoder_forward.1} parent=31 // pred_check
          %p241 = pneg %p62
        $region34: #{cnn_encoder_forward.1} parent=31 // pred_check_branch
          %243 = sbr.rel (%p241) target = $region36
        $region35: #{cnn_encoder_forward.1} parent=31 // pred_region
          %s244 = sadd.s32 %s27, %s28
          %s245 = smul.u32 8, %s244
          %p246 = scmp.lt.s32.totalorder %s26, 1
          %s247 = scalar_select %p246, %s26, 1
          %p248 = scmp.lt.s32.totalorder %s245, 7
          %s249 = scalar_select %p248, %s245, 7
          %s250 = smul.addr %s247, 8
          %s251 = sadd.s32 %s249, %s250
          %s252 = smul.addr %s251, 4
          %s253 = scalar_lea.vmem %s0, %s252
          %s254 = sadd.s32 %s27, %s28
          %s255 = smul.u32 8, %s254
        $region36: #{cnn_encoder_forward.1} parent=31 // pred_fallthru
          _
      $region32: #{cnn_encoder_forward.1} parent=5 // pred_fallthru
        _
      %p256 = scmp.le.s32.totalorder 1, %s19
      %p257 = scmp.lt.s32.totalorder %s19, 3
      %p258 = pnand %p256, %p257
      %p259 = pneg %p258
      // Predicated region
      $region37: #{cnn_encoder_forward.1} parent=5 // pred_check
        _
      $region38: #{cnn_encoder_forward.1} parent=5 // pred_check_branch
        %261 = sbr.rel (%p258) target = $region40
      $region39: #{cnn_encoder_forward.1} parent=5 // pred_region
        %s262 = ssub.s32 %s19, 1
        %s263 = sadd.s32 %s30, %s31
        %s264 = smul.u32 8, %s263
        %p265 = scmp.lt.s32.totalorder %s29, 1
        %s266 = scalar_select %p265, %s29, 1
        %p267 = scmp.lt.s32.totalorder %s264, 7
        %s268 = scalar_select %p267, %s264, 7
        %s269 = smul.addr %s266, 8
        %s270 = sadd.s32 %s268, %s269
        %s271 = smul.addr %s270, 4
        %s272 = scalar_lea.vmem %s0, %s271
        %p273 = pneg %p68
        %p274 = pneg %p65
        %p275 = pneg %p89
        %p276 = pneg %p86
        %p277 = pneg %p110
        %p278 = pneg %p107
        %p279 = pneg %p131
        %p280 = pneg %p128
        %p281 = pneg %p152
        %p282 = pneg %p149
        %p283 = pneg %p182
        %p284 = pneg %p179
        %s285 = sand.u32 %s169, 1
        %s286 = scalar_lea.sflag [#allocation3], %s285
        %s287 = sand.u32 %s169, 1
        %s288 = smul.addr %s287, 32
        %s289 = scalar_lea.vmem [#allocation2], %s288
        %p290 = pneg %p210
        %p291 = pneg %p207
        %s292 = sand.u32 %s197, 1
        %s293 = scalar_lea.sflag [#allocation5], %s292
        %s294 = sand.u32 %s197, 1
        %s295 = scalar_lea.vmem [#allocation4], %s294
        %s296 = sadd.s32 %s30, %s31
        %s297 = smul.u32 8, %s296
        %p298 = scmp.lt.s32.totalorder %s29, 1
        %s299 = scalar_select %p298, %s29, 1
        %p300 = scmp.lt.s32.totalorder %s297, 7
        %s301 = scalar_select %p300, %s297, 7
        %s302 = smul.addr %s299, 8
        %s303 = sadd.s32 %s301, %s302
        %s304 = smul.addr %s303, 4
        %s305 = scalar_lea.vmem %s0, %s304
        %s306 = sadd.s32 %s30, %s31
        %s307 = smul.u32 8, %s306
        %s308 = sadd.s32 %s30, %s31
        %s309 = smul.u32 8, %s308
        %v311 = vld [vmem:[%s305] sm:$0xf]
        %v312 = vld [vmem:[%s305 + $0x4] sm:$0xf]
        %v313 = vld [vmem:[%s305 + $0x8] sm:$0xf]
        %v314 = vld [vmem:[%s305 + $0xc] sm:$0xf]
        %v315 = vld [vmem:[%s305 + $0x10] sm:$0xf]
        %v316 = vld [vmem:[%s305 + $0x14] sm:$0xf]
        %v317 = vld [vmem:[%s305 + $0x18] sm:$0xf]
        %v318 = vld [vmem:[%s305 + $0x1c] sm:$0xf]
        %v319 = vld [vmem:[%s1] sm:$0xf]
        %v320 = vld [vmem:[%s1 + $0x4] sm:$0xf]
        %v321 = vld [vmem:[%s1 + $0x8] sm:$0xf]
        %v322 = vld [vmem:[%s1 + $0xc] sm:$0xf]
        %v323 = vld [vmem:[%s1 + $0x10] sm:$0x3]
        %v324 = vld [vmem:[%s2] sm:$0x1]
        %v326 = vlaneseq
        %v327 = vshrl.u32 %v326, 7
        %v328 = vsub.s32 0, %v327
        %v329 = vrot.slane %v324, %v328
        %v339 = vunpack.c.l.b16 %v311
        %v340 = vunpack.c.l.b16 %v312
        %v341 = vunpack.c.l.b16 %v313
        %v342 = vunpack.c.l.b16 %v314
        %v343 = vunpack.c.l.b16 %v315
        %v344 = vunpack.c.l.b16 %v316
        %v345 = vunpack.c.l.b16 %v317
        %v346 = vunpack.c.l.b16 %v318
        %v347 = vpack.c.b16 %v340, %v339
        %v348 = vpack.c.b16 %v342, %v341
        %v349 = vpack.c.b16 %v344, %v343
        %v350 = vpack.c.b16 %v346, %v345
        %v356 = vunpack.c.l.b16 %v319
        %v357 = vunpack.c.l.b16 %v320
        %v358 = vunpack.c.l.b16 %v321
        %v359 = vunpack.c.l.b16 %v322
        %v360 = vunpack.c.l.b16 %v323
        %v361 = vpack.c.b16 %v357, %v356
        %v362 = vpack.c.b16 %v359, %v358
        %v363 = vpack.c.b16 %v360, %v360
        %vm366 = vcmask 293888
        %v368 = vsel %vm366, %v347, 0
        %v371 = vsel %vm366, %v348, 0
        %v374 = vsel %vm366, %v349, 0
        %v377 = vsel %vm366, %v350, 0
        %vm379 = vcmask 1041408
        %v381 = vsel %vm379, %v363, 0
        %383 = vmatprep.subr.bf16.mxu0 0
        %384 = vmatpush1.bf16.msra.mxu0 0
        %385 = vmatprep.subr.bf16.mxu0 0
        %386 = vmatpush1.bf16.msra.mxu0 0
        %387 = vmatprep.subr.bf16.mxu0 0
        %388 = vmatpush1.bf16.msra.mxu0 0
        %389 = vmatprep.subr.bf16.mxu0 0
        %390 = vmatpush1.bf16.msra.mxu0 0
        %391 = vmatprep.subr.bf16.mxu0 0
        %392 = vmatpush1.bf16.msra.mxu0 0
        %393 = vmatprep.subr.bf16.mxu0 0
        %394 = vmatpush1.bf16.msra.mxu0 %v381
        %395 = vmatprep.subr.bf16.mxu0 0
        %396 = vmatpush1.bf16.msra.mxu0 %v362
        %397 = vmatprep.subr.bf16.mxu0 0
        %398 = vmatpush1.bf16.msra.mxu0 %v361
        %399 = vmatprep.subr.bf16.mxu0 0
        %400 = vmatpush2.bf16.msra.mxu0 0
        %401 = vmatprep.subr.bf16.mxu0 0
        %402 = vmatpush2.bf16.msra.mxu0 0
        %403 = vmatprep.subr.bf16.mxu0 0
        %404 = vmatpush2.bf16.msra.mxu0 0
        %405 = vmatprep.subr.bf16.mxu0 0
        %406 = vmatpush2.bf16.msra.mxu0 0
        %407 = vmatprep.subr.bf16.mxu0 0
        %408 = vmatpush2.bf16.msra.mxu0 0
        %409 = vmatprep.subr.bf16.mxu0 0
        %410 = vmatpush2.bf16.msra.mxu0 0
        %411 = vmatprep.subr.bf16.mxu0 0
        %412 = vmatpush2.bf16.msra.mxu0 0
        %413 = vmatprep.subr.bf16.mxu0 0
        %414 = vmatpush2.bf16.msra.mxu0 0
        %415 = vmatprep.mubr.bf16.mxu0 0
        %416 = vmatmul.mubr.bf16.gmra.mxu0 %v368
        %v417 = vpop.f32.mrf.mxu0
        %v418 = vadd.f32 %v329, %v417
        %v419 = vpop.f32.mrf.mxu0
        %v420 = vpop.f32.mrf.mxu0
        %v421 = vadd.f32 %v329, %v420
        %v422 = vpop.f32.mrf.mxu0
        %423 = vmatprep.mubr.bf16.mxu0 0
        %424 = vmatmul.mubr.bf16.gmra.mxu0 %v371
        %v425 = vpop.f32.mrf.mxu0
        %v426 = vadd.f32 %v329, %v425
        %v427 = vpop.f32.mrf.mxu0
        %v428 = vpop.f32.mrf.mxu0
        %v429 = vadd.f32 %v329, %v428
        %v430 = vpop.f32.mrf.mxu0
        %431 = vmatprep.mubr.bf16.mxu0 0
        %432 = vmatmul.mubr.bf16.gmra.mxu0 %v374
        %v433 = vpop.f32.mrf.mxu0
        %v434 = vadd.f32 %v329, %v433
        %v435 = vpop.f32.mrf.mxu0
        %v436 = vpop.f32.mrf.mxu0
        %v437 = vadd.f32 %v329, %v436
        %v438 = vpop.f32.mrf.mxu0
        %439 = vmatprep.mubr.bf16.mxu0 0
        %440 = vmatmul.mubr.bf16.gmra.mxu0 %v377
        %v441 = vpop.f32.mrf.mxu0
        %v442 = vadd.f32 %v329, %v441
        %v443 = vpop.f32.mrf.mxu0
        %v444 = vpop.f32.mrf.mxu0
        %v445 = vadd.f32 %v329, %v444
        %v446 = vpop.f32.mrf.mxu0
        %447 = vdwg.mxu0
        %v448 = vmax.f32 %v418, 0.0
        %v449 = vmax.f32 %v421, 0.0
        %v450 = vmax.f32 %v426, 0.0
        %v451 = vmax.f32 %v429, 0.0
        %v452 = vmax.f32 %v434, 0.0
        %v453 = vmax.f32 %v437, 0.0
        %v454 = vmax.f32 %v442, 0.0
        %v455 = vmax.f32 %v445, 0.0
        %v456 = vpack.c.bf16 %v449, %v448
        %v457 = vpack.c.bf16 %v451, %v450
        %v458 = vpack.c.bf16 %v453, %v452
        %v459 = vpack.c.bf16 %v455, %v454
        %v460 = vld [vmem:[%s3] sm:$0xf]
        %v461 = vld [vmem:[%s3 + $0x4] sm:$0xf]
        %v462 = vld [vmem:[%s3 + $0x8] sm:$0xf]
        %v463 = vld [vmem:[%s3 + $0xc] sm:$0xf]
        %v464 = vld [vmem:[%s3 + $0x10] sm:$0xf]
        %v465 = vld [vmem:[%s3 + $0x14] sm:$0xf]
        %v466 = vld [vmem:[%s3 + $0x18] sm:$0xf]
        %v467 = vld [vmem:[%s3 + $0x1c] sm:$0xf]
        %v468 = vld [vmem:[%s3 + $0x20] sm:$0xf]
        %v469 = vld [vmem:[%s3 + $0x24] sm:$0xf]
        %v470 = vld [vmem:[%s3 + $0x28] sm:$0xf]
        %v471 = vld [vmem:[%s3 + $0x2c] sm:$0xf]
        %v472 = vld [vmem:[%s3 + $0x30] sm:$0xf]
        %v473 = vld [vmem:[%s3 + $0x34] sm:$0xf]
        %v474 = vld [vmem:[%s3 + $0x38] sm:$0xf]
        %v475 = vld [vmem:[%s3 + $0x3c] sm:$0xf]
        %v476 = vld [vmem:[%s4] sm:$0x1]
        %v478 = vlaneseq
        %v479 = vshrl.u32 %v478, 7
        %v480 = vsub.s32 0, %v479
        %v481 = vrot.slane %v476, %v480
        %v499 = vunpack.c.l.b16 %v460
        %v500 = vunpack.c.l.b16 %v461
        %v501 = vunpack.c.l.b16 %v462
        %v502 = vunpack.c.l.b16 %v463
        %v503 = vunpack.c.l.b16 %v464
        %v504 = vunpack.c.l.b16 %v465
        %v505 = vunpack.c.l.b16 %v466
        %v506 = vunpack.c.l.b16 %v467
        %v507 = vunpack.c.l.b16 %v468
        %v508 = vunpack.c.l.b16 %v469
        %v509 = vunpack.c.l.b16 %v470
        %v510 = vunpack.c.l.b16 %v471
        %v511 = vunpack.c.l.b16 %v472
        %v512 = vunpack.c.l.b16 %v473
        %v513 = vunpack.c.l.b16 %v474
        %v514 = vunpack.c.l.b16 %v475
        %v515 = vpack.c.b16 %v500, %v499
        %v516 = vpack.c.b16 %v502, %v501
        %v517 = vpack.c.b16 %v504, %v503
        %v518 = vpack.c.b16 %v506, %v505
        %v519 = vpack.c.b16 %v508, %v507
        %v520 = vpack.c.b16 %v510, %v509
        %v521 = vpack.c.b16 %v512, %v511
        %v522 = vpack.c.b16 %v514, %v513
        %531 = vmatprep.subr.bf16.mxu0 0
        %532 = vmatpush1.bf16.msra.mxu0 %v522
        %533 = vmatprep.subr.bf16.mxu0 0
        %534 = vmatpush1.bf16.msra.mxu0 %v521
        %535 = vmatprep.subr.bf16.mxu0 0
        %536 = vmatpush1.bf16.msra.mxu0 %v520
        %537 = vmatprep.subr.bf16.mxu0 0
        %538 = vmatpush1.bf16.msra.mxu0 %v519
        %539 = vmatprep.subr.bf16.mxu0 0
        %540 = vmatpush1.bf16.msra.mxu0 %v518
        %541 = vmatprep.subr.bf16.mxu0 0
        %542 = vmatpush1.bf16.msra.mxu0 %v517
        %543 = vmatprep.subr.bf16.mxu0 0
        %544 = vmatpush1.bf16.msra.mxu0 %v516
        %545 = vmatprep.subr.bf16.mxu0 0
        %546 = vmatpush1.bf16.msra.mxu0 %v515
        %547 = vmatprep.subr.bf16.mxu0 0
        %548 = vmatpush2.bf16.msra.mxu0 0
        %549 = vmatprep.subr.bf16.mxu0 0
        %550 = vmatpush2.bf16.msra.mxu0 0
        %551 = vmatprep.subr.bf16.mxu0 0
        %552 = vmatpush2.bf16.msra.mxu0 0
        %553 = vmatprep.subr.bf16.mxu0 0
        %554 = vmatpush2.bf16.msra.mxu0 0
        %555 = vmatprep.subr.bf16.mxu0 0
        %556 = vmatpush2.bf16.msra.mxu0 0
        %557 = vmatprep.subr.bf16.mxu0 0
        %558 = vmatpush2.bf16.msra.mxu0 0
        %559 = vmatprep.subr.bf16.mxu0 0
        %560 = vmatpush2.bf16.msra.mxu0 0
        %561 = vmatprep.subr.bf16.mxu0 0
        %562 = vmatpush2.bf16.msra.mxu0 0
        %563 = vmatprep.mubr.bf16.mxu0 0
        %564 = vmatmul.mubr.bf16.gmra.mxu0 %v456
        %v565 = vpop.f32.mrf.mxu0
        %v566 = vadd.f32 %v481, %v565
        %v567 = vpop.f32.mrf.mxu0
        %v568 = vpop.f32.mrf.mxu0
        %v569 = vadd.f32 %v481, %v568
        %v570 = vpop.f32.mrf.mxu0
        %571 = vmatprep.mubr.bf16.mxu0 0
        %572 = vmatmul.mubr.bf16.gmra.mxu0 %v457
        %v573 = vpop.f32.mrf.mxu0
        %v574 = vadd.f32 %v481, %v573
        %v575 = vpop.f32.mrf.mxu0
        %v576 = vpop.f32.mrf.mxu0
        %v577 = vadd.f32 %v481, %v576
        %v578 = vpop.f32.mrf.mxu0
        %579 = vmatprep.mubr.bf16.mxu0 0
        %580 = vmatmul.mubr.bf16.gmra.mxu0 %v458
        %v581 = vpop.f32.mrf.mxu0
        %v582 = vadd.f32 %v481, %v581
        %v583 = vpop.f32.mrf.mxu0
        %v584 = vpop.f32.mrf.mxu0
        %v585 = vadd.f32 %v481, %v584
        %v586 = vpop.f32.mrf.mxu0
        %587 = vmatprep.mubr.bf16.mxu0 0
        %588 = vmatmul.mubr.bf16.gmra.mxu0 %v459
        %v589 = vpop.f32.mrf.mxu0
        %v590 = vadd.f32 %v481, %v589
        %v591 = vpop.f32.mrf.mxu0
        %v592 = vpop.f32.mrf.mxu0
        %v593 = vadd.f32 %v481, %v592
        %v594 = vpop.f32.mrf.mxu0
        %595 = vdwg.mxu0
        %v596 = vmax.f32 %v566, 0.0
        %v597 = vmax.f32 %v569, 0.0
        %v598 = vmax.f32 %v574, 0.0
        %v599 = vmax.f32 %v577, 0.0
        %v600 = vmax.f32 %v582, 0.0
        %v601 = vmax.f32 %v585, 0.0
        %v602 = vmax.f32 %v590, 0.0
        %v603 = vmax.f32 %v593, 0.0
        %v604 = vpack.c.bf16 %v597, %v596
        %v605 = vpack.c.bf16 %v599, %v598
        %v606 = vpack.c.bf16 %v601, %v600
        %v607 = vpack.c.bf16 %v603, %v602
        %v612 = vunpack.c.l.b16 %v604
        %v613 = vunpack.c.h.b16 %v604
        %v614 = vunpack.c.l.b16 %v605
        %v615 = vunpack.c.h.b16 %v605
        %v616 = vunpack.c.l.b16 %v606
        %v617 = vunpack.c.h.b16 %v606
        %v618 = vunpack.c.l.b16 %v607
        %v619 = vunpack.c.h.b16 %v607
        %v620 = vpack.c.b16 %v612, %v612
        %v621 = vpack.c.b16 %v613, %v613
        %v622 = vpack.c.b16 %v614, %v614
        %v623 = vpack.c.b16 %v615, %v615
        %v624 = vpack.c.b16 %v616, %v616
        %v625 = vpack.c.b16 %v617, %v617
        %v626 = vpack.c.b16 %v618, %v618
        %v627 = vpack.c.b16 %v619, %v619
        %636 = vst [vmem:[%s289] sm:$0xf] %v620
        %637 = vst [vmem:[%s289 + $0x4] sm:$0xf] %v621
        %638 = vst [vmem:[%s289 + $0x8] sm:$0xf] %v622
        %639 = vst [vmem:[%s289 + $0xc] sm:$0xf] %v623
        %640 = vst [vmem:[%s289 + $0x10] sm:$0xf] %v624
        %641 = vst [vmem:[%s289 + $0x14] sm:$0xf] %v625
        %642 = vst [vmem:[%s289 + $0x18] sm:$0xf] %v626
        %643 = vst [vmem:[%s289 + $0x1c] sm:$0xf] %v627
        %p644 = scmp.eq.s32.totalorder %s31, 0
        // Predicated region
        $region41: #{cnn_encoder_forward.1} parent=39 // pred_check
          %p645 = pneg %p644
        $region42: #{cnn_encoder_forward.1} parent=39 // pred_check_branch
          %647 = sbr.rel (%p645) target = $region44
        $region43: #{cnn_encoder_forward.1} parent=39 // pred_region
          %648 = vst [vmem:[%s295] sm:$0x1] 0.0
        $region44: #{cnn_encoder_forward.1} parent=39 // pred_fallthru
          _
        %v649 = vld [vmem:[%s295] sm:$0x1]
        %v650 = vadd.f32 %v596, %v597
        %v651 = vadd.f32 %v650, %v598
        %v652 = vadd.f32 %v651, %v599
        %v653 = vadd.f32 %v652, %v600
        %v654 = vadd.f32 %v653, %v601
        %v655 = vadd.f32 %v654, %v602
        %v656 = vadd.f32 %v655, %v603
        %v657 = vrot.slane %v656, 4
        %v658 = vadd.f32 %v656, %v657
        %v659 = vrot.slane %v658, 2
        %v660 = vadd.f32 %v658, %v659
        %v661 = vrot.slane %v660, 1
        %v662 = vadd.f32 %v660, %v661
        %v663 = vadd.f32 %v649, %v662
        %664 = vst [vmem:[%s295] sm:$0x1] %v663
        // Predicated region
        $region45: #{cnn_encoder_forward.1} parent=39 // pred_check
          %p665 = pneg %p644
        $region46: #{cnn_encoder_forward.1} parent=39 // pred_check_branch
          %667 = sbr.rel (%p665) target = $region48
        $region47: #{cnn_encoder_forward.1} parent=39 // pred_region
          %v668 = vld [vmem:[%s295] sm:$0x1]
          %v669 = vmul.f32 %v668, 0.015625
          %670 = vst [vmem:[%s295] sm:$0x1] %v669
        $region48: #{cnn_encoder_forward.1} parent=39 // pred_fallthru
          _
        %s671 = sand.u32 %s169, 1
        %s672 = scalar_lea.sflag [#allocation3], %s671
        %s673 = sand.u32 %s169, 1
        %s674 = smul.addr %s673, 32
        %s675 = scalar_lea.vmem [#allocation2], %s674
        %s676 = sand.u32 %s197, 1
        %s677 = scalar_lea.sflag [#allocation5], %s676
        %s678 = sand.u32 %s197, 1
        %s679 = scalar_lea.vmem [#allocation4], %s678
        // Predicated region
        $region49: #{cnn_encoder_forward.1} parent=39 // pred_check
          %p680 = pneg %p179
        $region50: #{cnn_encoder_forward.1} parent=39 // pred_check_branch
          %682 = sbr.rel (%p680) target = $region52
        $region51: #{cnn_encoder_forward.1} parent=39 // pred_region
          %s683 = sadd.s32 %s30, %s31
          %s684 = smul.u32 8, %s683
          %s686 = ssub.s32 512, 512
          %687 = vsyncadd %s672, %s686
          %s688 = smul.addr %s29, 8
          %s689 = sadd.s32 %s684, %s688
          %s690 = smul.addr %s689, 64
          %s691 = scalar_lea.hbm %s5, %s690
          %s692 = sshll.u32 %s675, 4
          %s693 = int_to_ptr.vmem [resolvable:$true] %s692
          %698 = dma.vmem_to_hbm [thread:$0]  %s693, 512, %s691, %s672, 64, 64, 4
        $region52: #{cnn_encoder_forward.1} parent=39 // pred_fallthru
          _
        // Predicated region
        $region53: #{cnn_encoder_forward.1} parent=39 // pred_check
          %p699 = pneg %p207
        $region54: #{cnn_encoder_forward.1} parent=39 // pred_check_branch
          %701 = sbr.rel (%p699) target = $region56
        $region55: #{cnn_encoder_forward.1} parent=39 // pred_region
          %s703 = ssub.s32 16, 16
          %704 = vsyncadd %s677, %s703
          %s705 = sadd.s32 %s30, %s29
          %s706 = smul.addr %s705, 16
          %s707 = scalar_lea.hbm %s6, %s706
          %s709 = sshll.u32 %s679, 4
          %s710 = int_to_ptr.vmem [resolvable:$true] %s709
          %712 = dma.vmem_to_hbm [thread:$0]  %s710, 16, %s707, %s677
        $region56: #{cnn_encoder_forward.1} parent=39 // pred_fallthru
          _
      $region40: #{cnn_encoder_forward.1} parent=5 // pred_fallthru
        _
      %p713 = scmp.le.s32.totalorder 2, %s19
      // Predicated region
      $region57: #{cnn_encoder_forward.1} parent=5 // pred_check
        %p714 = pneg %p713
      $region58: #{cnn_encoder_forward.1} parent=5 // pred_check_branch
        %716 = sbr.rel (%p714) target = $region60
      $region59: #{cnn_encoder_forward.1} parent=5 // pred_region
        %s717 = ssub.s32 %s19, 2
        // Predicated region
        $region61: #{cnn_encoder_forward.1} parent=59 // pred_check
          %p718 = pneg %p185
        $region62: #{cnn_encoder_forward.1} parent=59 // pred_check_branch
          %720 = sbr.rel (%p718) target = $region64
        $region63: #{cnn_encoder_forward.1} parent=59 // pred_region
          %s721 = sand.u32 %s170, 1
          %s722 = scalar_lea.sflag [#allocation3], %s721
          %s723 = sand.u32 %s170, 1
          %s724 = smul.addr %s723, 32
          %s725 = scalar_lea.vmem [#allocation2], %s724
          %726 = dma.done %s722, 512
        $region64: #{cnn_encoder_forward.1} parent=59 // pred_fallthru
          _
        // Predicated region
        $region65: #{cnn_encoder_forward.1} parent=59 // pred_check
          %p727 = pneg %p213
        $region66: #{cnn_encoder_forward.1} parent=59 // pred_check_branch
          %729 = sbr.rel (%p727) target = $region68
        $region67: #{cnn_encoder_forward.1} parent=59 // pred_region
          %s730 = sand.u32 %s198, 1
          %s731 = scalar_lea.sflag [#allocation5], %s730
          %s732 = sand.u32 %s198, 1
          %s733 = scalar_lea.vmem [#allocation4], %s732
          %734 = dma.done %s731, 16
        $region68: #{cnn_encoder_forward.1} parent=59 // pred_fallthru
          _
      $region60: #{cnn_encoder_forward.1} parent=5 // pred_fallthru
        _
    $region6: #{cnn_encoder_forward.1} parent=1 // loop_footer
      %s23 = sadd.s32 1, %s19
    $region7: #{cnn_encoder_forward.1} parent=1 // loop_footer_branch
      %18 = sbr.rel target = $region3
    $region8: #{cnn_encoder_forward.1} parent=1 // loop_exit
      _
    %735 = vsyncpa [#allocation3], 1
    %s736 = scalar_lea.sflag [#allocation3], 1
    %737 = vsyncpa %s736, 1
    %738 = vsyncpa [#allocation5], 1
    %s739 = scalar_lea.sflag [#allocation5], 1
    %740 = vsyncpa %s739, 1

</llo_original>
